<compile_context>
chip_gen: v7x
topology: tpu7x:2x2x1
jax: 0.10.0
libtpu: 0.0.40
codegen_flags: <defaults>
</compile_context>

<pallas_src>
import jax
import jax.numpy as jnp
from jax.experimental import pallas as pl
from jax.experimental.pallas import tpu as pltpu


# ---------------------------------------------------------------------------
# Kernel
# ---------------------------------------------------------------------------
def _rotary_kernel(q_ref, k_ref, cos_ref, sin_ref, qo_ref, ko_ref):
    # q_ref / k_ref / qo_ref / ko_ref : (g_n, t_s, D)  activation dtype
    # cos_ref / sin_ref               : (t_s, D)        float32 (sign-folded sin)
    cos = cos_ref[...]
    sin = sin_ref[...]
    q = q_ref[...]
    k = k_ref[...]
    half = q.shape[-1] // 2

    # rotate_half(x) * sin == roll(x, D/2, lanes) * sin_signed
    # (roll by half swaps the two halves; the minus sign lives in the table).
    q_rot = pltpu.roll(q, shift=half, axis=q.ndim - 1)
    k_rot = pltpu.roll(k, shift=half, axis=k.ndim - 1)

    # f32 math (cos/sin are f32 -> promotion), cast only on store.
    qo_ref[...] = (q * cos + q_rot * sin).astype(qo_ref.dtype)
    ko_ref[...] = (k * cos + k_rot * sin).astype(ko_ref.dtype)


# ---------------------------------------------------------------------------
# Table construction (mirrors Rotary.__init__ + cached buffers in forward())
# ---------------------------------------------------------------------------
def _make_tables(seq_len: int, dim: int, base: int = 10000):
    inv_freq = 1.0 / (base ** (jnp.arange(0, dim, 2, dtype=jnp.float32) / dim))
    t = jnp.arange(seq_len, dtype=jnp.float32)
    freqs = jnp.einsum("i,j->ij", t, inv_freq)          # (S, D/2)
    emb = jnp.concatenate([freqs, freqs], axis=-1)      # (S, D)
    return jnp.cos(emb), jnp.sin(emb)


# ---------------------------------------------------------------------------
# Tile selection: fixed per-buffer byte target, pl.cdiv grids (partial
# trailing blocks are fine for an elementwise kernel).  A block can never
# exceed the target, so the live double-buffered footprint is bounded.
# ---------------------------------------------------------------------------
_TARGET_BLOCK_BYTES = 3 << 20       # per q/k/qo/ko buffer
_VMEM_LIMIT_CAP = 48 << 20          # < v7x 64 MiB physical; fine on v5e/v6e


def _pick_tiles(N: int, S: int, D: int, itemsize: int):
    rows_budget = max(8, _TARGET_BLOCK_BYTES // max(1, D * itemsize))

    if S <= rows_budget:
        t_s = S                              # full axis: always a legal block dim
    else:
        t_s = (rows_budget // 8) * 8         # multiple of 8; trailing block partial

    g_n = max(1, min(N, rows_budget // max(1, t_s)))
    return g_n, t_s


# ---------------------------------------------------------------------------
# Wrapper: equivalent of Rotary(dim).forward(q, k, device) -> (q_rot, k_rot)
# ---------------------------------------------------------------------------
def rotary_apply(q, k, base: int = 10000):
    B, H, S, D = q.shape
    assert k.shape == (B, H, S, D)
    assert D % 2 == 0, "head_dim must be even for RoPE"

    N = B * H
    qf = q.reshape(N, S, D)
    kf = k.reshape(N, S, D)

    # Tables stay in f32; sign is folded into sin so the kernel can use roll.
    cos, sin32 = _make_tables(S, D, base)
    half = D // 2
    sin_signed = jnp.concatenate([-sin32[:, :half], sin32[:, half:]], axis=-1)

    itemsize = jnp.dtype(q.dtype).itemsize
    g_n, t_s = _pick_tiles(N, S, D, itemsize)

    # S tiles on the OUTER grid axis, N tiles on the INNER axis: cos/sin block
    # index is constant across consecutive (inner) steps, so Pallas does not
    # re-DMA the table tile per n step.
    grid = (pl.cdiv(S, t_s), pl.cdiv(N, g_n))

    qk_spec = pl.BlockSpec((g_n, t_s, D), lambda s, n: (n, s, 0))
    cs_spec = pl.BlockSpec((t_s, D), lambda s, n: (s, 0))

    # VMEM limit: actual double-buffered live set plus headroom, clamped under
    # v7x's 64 MiB physical VMEM.
    big_bytes = g_n * t_s * D * itemsize
    tbl_bytes = t_s * D * 4
    needed = 2 * (4 * big_bytes + 2 * tbl_bytes)
    vmem_limit = int(min(max(needed * 3 // 2, 32 << 20), _VMEM_LIMIT_CAP))

    cost = pl.CostEstimate(
        flops=6 * N * S * D,                       # 2 mul + 1 add per elem, q and k
        transcendentals=0,
        bytes_accessed=itemsize * 4 * N * S * D + 4 * 2 * S * D,
    )

    q_out, k_out = pl.pallas_call(
        _rotary_kernel,
        out_shape=(
            jax.ShapeDtypeStruct((N, S, D), q.dtype),
            jax.ShapeDtypeStruct((N, S, D), k.dtype),
        ),
        grid_spec=pltpu.PrefetchScalarGridSpec(
            num_scalar_prefetch=0,
            grid=grid,
            in_specs=[qk_spec, qk_spec, cs_spec, cs_spec],
            out_specs=[qk_spec, qk_spec],
        ),
        compiler_params=pltpu.CompilerParams(
            dimension_semantics=("parallel", "parallel"),
            vmem_limit_bytes=vmem_limit,
        ),
        cost_estimate=cost,
    )(qf, kf, cos, sin_signed)

    return q_out.reshape(B, H, S, D), k_out.reshape(B, H, S, D)


# ---------------------------------------------------------------------------
# Pure-JAX reference mirroring the PyTorch module exactly.
# ---------------------------------------------------------------------------
def _rotary_reference(q, k, base: int = 10000):
    S, D = q.shape[-2], q.shape[-1]
    cos, sin = _make_tables(S, D, base)
    cos = cos[None, None]
    sin = sin[None, None]

    def rotate_half(x):
        x1, x2 = jnp.split(x, 2, axis=-1)
        return jnp.concatenate([-x2, x1], axis=-1)

    return q * cos + rotate_half(q) * sin, k * cos + rotate_half(k) * sin


if __name__ == "__main__":
    key = jax.random.PRNGKey(0)
    kq, kk = jax.random.split(key)
    B, H, S, D = 2, 4, 16, 128   # lane-dense head_dim (multiple of 128)
    q = jax.random.normal(kq, (B, H, S, D), dtype=jnp.float32)
    k = jax.random.normal(kk, (B, H, S, D), dtype=jnp.float32)

    q_out, k_out = rotary_apply(q, k)
    jax.block_until_ready((q_out, k_out))

    q_ref, k_ref = _rotary_reference(q, k)
    assert jnp.allclose(q_out, q_ref, atol=1e-5, rtol=1e-5)
    assert jnp.allclose(k_out, k_ref, atol=1e-5, rtol=1e-5)

    print("KERNEL_OK")
</pallas_src>

<mosaic_0001>
module attributes {stable_mosaic.version = 11 : i64} {
  func.func @_rotary_kernel(%arg0: i32, %arg1: i32, %arg2: memref<8x16x128xf32, #tpu.memory_space<vmem>>, %arg3: memref<8x16x128xf32, #tpu.memory_space<vmem>>, %arg4: memref<16x128xf32, #tpu.memory_space<vmem>>, %arg5: memref<16x128xf32, #tpu.memory_space<vmem>>, %arg6: memref<8x16x128xf32, #tpu.memory_space<vmem>>, %arg7: memref<8x16x128xf32, #tpu.memory_space<vmem>>) attributes {dimension_semantics = [#tpu.dimension_semantics<parallel>, #tpu.dimension_semantics<parallel>], iteration_bounds = array<i64: 1, 1>, scalar_prefetch = 0 : i64, scratch_operands = 0 : i64, tpu.core_type = #tpu.core_type<tc>, window_params = [{transform_indices = @transform_0, window_bounds = array<i64: 8, 16, 128>}, {transform_indices = @transform_1, window_bounds = array<i64: 8, 16, 128>}, {transform_indices = @transform_2, window_bounds = array<i64: 16, 128>}, {transform_indices = @transform_3, window_bounds = array<i64: 16, 128>}, {transform_indices = @transform_4, window_bounds = array<i64: 8, 16, 128>}, {transform_indices = @transform_5, window_bounds = array<i64: 8, 16, 128>}]} {
    %c0 = arith.constant 0 : index
    %c0_0 = arith.constant 0 : index
    %0 = vector.load %arg4[%c0, %c0_0] : memref<16x128xf32, #tpu.memory_space<vmem>>, vector<16x128xf32>
    %c0_1 = arith.constant 0 : index
    %c0_2 = arith.constant 0 : index
    %1 = vector.load %arg5[%c0_1, %c0_2] : memref<16x128xf32, #tpu.memory_space<vmem>>, vector<16x128xf32>
    %c0_3 = arith.constant 0 : index
    %c0_4 = arith.constant 0 : index
    %c0_5 = arith.constant 0 : index
    %2 = vector.load %arg2[%c0_3, %c0_4, %c0_5] : memref<8x16x128xf32, #tpu.memory_space<vmem>>, vector<8x16x128xf32>
    %c0_6 = arith.constant 0 : index
    %c0_7 = arith.constant 0 : index
    %c0_8 = arith.constant 0 : index
    %3 = vector.load %arg3[%c0_6, %c0_7, %c0_8] : memref<8x16x128xf32, #tpu.memory_space<vmem>>, vector<8x16x128xf32>
    %c64_i32 = arith.constant 64 : i32
    %4 = tpu.dynamic_rotate %2 by %c64_i32 dim 2 : vector<8x16x128xf32>, i32 -> vector<8x16x128xf32>
    %c64_i32_9 = arith.constant 64 : i32
    %5 = tpu.dynamic_rotate %3 by %c64_i32_9 dim 2 : vector<8x16x128xf32>, i32 -> vector<8x16x128xf32>
    %6 = vector.shape_cast %0 : vector<16x128xf32> to vector<1x16x128xf32>
    %7 = vector.broadcast %6 : vector<1x16x128xf32> to vector<8x16x128xf32>
    %8 = arith.mulf %2, %7 : vector<8x16x128xf32>
    %9 = vector.shape_cast %1 : vector<16x128xf32> to vector<1x16x128xf32>
    %10 = vector.broadcast %9 : vector<1x16x128xf32> to vector<8x16x128xf32>
    %11 = arith.mulf %4, %10 : vector<8x16x128xf32>
    %12 = arith.addf %8, %11 : vector<8x16x128xf32>
    %c0_10 = arith.constant 0 : index
    %c0_11 = arith.constant 0 : index
    %c0_12 = arith.constant 0 : index
    %13 = vector.load %arg6[%c0_10, %c0_11, %c0_12] : memref<8x16x128xf32, #tpu.memory_space<vmem>>, vector<8x16x128xf32>
    tpu.vector_store %arg6[%c0_10, %c0_11, %c0_12], %12 {strides = array<i32>} : memref<8x16x128xf32, #tpu.memory_space<vmem>>, vector<8x16x128xf32>,
    %14 = vector.shape_cast %0 : vector<16x128xf32> to vector<1x16x128xf32>
    %15 = vector.broadcast %14 : vector<1x16x128xf32> to vector<8x16x128xf32>
    %16 = arith.mulf %3, %15 : vector<8x16x128xf32>
    %17 = vector.shape_cast %1 : vector<16x128xf32> to vector<1x16x128xf32>
    %18 = vector.broadcast %17 : vector<1x16x128xf32> to vector<8x16x128xf32>
    %19 = arith.mulf %5, %18 : vector<8x16x128xf32>
    %20 = arith.addf %16, %19 : vector<8x16x128xf32>
    %c0_13 = arith.constant 0 : index
    %c0_14 = arith.constant 0 : index
    %c0_15 = arith.constant 0 : index
    %21 = vector.load %arg7[%c0_13, %c0_14, %c0_15] : memref<8x16x128xf32, #tpu.memory_space<vmem>>, vector<8x16x128xf32>
    tpu.vector_store %arg7[%c0_13, %c0_14, %c0_15], %20 {strides = array<i32>} : memref<8x16x128xf32, #tpu.memory_space<vmem>>, vector<8x16x128xf32>,
    return
  }
  func.func @transform_0(%arg0: i32, %arg1: i32) -> (i32, i32, i32) {
    %c0_i32 = arith.constant 0 : i32
    %c0_i32_0 = arith.constant 0 : i32
    return %arg1, %arg0, %c0_i32 : i32, i32, i32
  }
  func.func @transform_1(%arg0: i32, %arg1: i32) -> (i32, i32, i32) {
    %c0_i32 = arith.constant 0 : i32
    %c0_i32_0 = arith.constant 0 : i32
    return %arg1, %arg0, %c0_i32 : i32, i32, i32
  }
  func.func @transform_2(%arg0: i32, %arg1: i32) -> (i32, i32) {
    %c0_i32 = arith.constant 0 : i32
    %c0_i32_0 = arith.constant 0 : i32
    return %arg0, %c0_i32 : i32, i32
  }
  func.func @transform_3(%arg0: i32, %arg1: i32) -> (i32, i32) {
    %c0_i32 = arith.constant 0 : i32
    %c0_i32_0 = arith.constant 0 : i32
    return %arg0, %c0_i32 : i32, i32
  }
  func.func @transform_4(%arg0: i32, %arg1: i32) -> (i32, i32, i32) {
    %c0_i32 = arith.constant 0 : i32
    %c0_i32_0 = arith.constant 0 : i32
    return %arg1, %arg0, %c0_i32 : i32, i32, i32
  }
  func.func @transform_5(%arg0: i32, %arg1: i32) -> (i32, i32, i32) {
    %c0_i32 = arith.constant 0 : i32
    %c0_i32_0 = arith.constant 0 : i32
    return %arg1, %arg0, %c0_i32 : i32, i32, i32
  }
}

</mosaic_0001>

<llo_original>
// kernel: tpu_custom_call.1
$region0: #{tpu_custom_call.1}
  #allocation0 [shape = 'u32[]', space=smem, size = 0x4, offset = 0x4, fixed_abs, tag = 'smem constant byte address 0x4 - core index']
  #allocation1 [shape = 'u32[144,128]{1,0:T(1,128)}', space=vmem, size = 0x12000, scoped, tag = 'internal scratch']
  %s0 = inlined_call_operand.hbm [shape: f32[8,16,128], index: 0, kind: input, shape index: {}]
  %s1 = inlined_call_operand.hbm [shape: f32[8,16,128], index: 1, kind: input, shape index: {}]
  %s2 = inlined_call_operand.hbm [shape: f32[16,128], index: 2, kind: input, shape index: {}]
  %s3 = inlined_call_operand.hbm [shape: f32[16,128], index: 3, kind: input, shape index: {}]
  %s4 = inlined_call_operand.hbm [shape: f32[8,16,128], index: 4, kind: output, shape index: {0}]
  %s5 = inlined_call_operand.hbm [shape: f32[8,16,128], index: 5, kind: output, shape index: {1}]
  %6 = xla_tuple %s4, %s5
  %s7 = sld [smem:[#allocation0]]
  $region50: #{tpu_custom_call.1} parent=0
    _
  %s9 = ssub.s32 1, %s7
  %s10 = scalar_select 0, %s9, %s7
  $region1: #{tpu_custom_call.1} parent=0
    #allocation2 [shape = 'u8[65536]{0}', space=vmem, size = 0x10000, scoped, tag = 'input window, operand 0, single buffered']
    #allocation3 [shape = 's32[1]{0}', space=sflag, size = 0x4, scoped, tag = 'scoped memory for tpu_custom_call.1']
    #allocation4 [shape = 's32[1]{0}', space=sflag, size = 0x4, scoped, tag = 'scoped memory for tpu_custom_call.1']
    #allocation5 [shape = 'u8[65536]{0}', space=vmem, size = 0x10000, scoped, tag = 'input window, operand 1, single buffered']
    #allocation6 [shape = 's32[1]{0}', space=sflag, size = 0x4, scoped, tag = 'scoped memory for tpu_custom_call.1']
    #allocation7 [shape = 'u8[8192]{0}', space=vmem, size = 0x2000, scoped, tag = 'input window, operand 2, single buffered']
    #allocation8 [shape = 'u8[8192]{0}', space=vmem, size = 0x2000, scoped, tag = 'input window, operand 3, single buffered']
    #allocation9 [shape = 's32[1]{0}', space=sflag, size = 0x4, scoped, tag = 'scoped memory for tpu_custom_call.1']
    #allocation10 [shape = 'u8[65536]{0}', space=vmem, size = 0x10000, scoped, tag = 'output window, operand 0, single buffered']
    #allocation11 [shape = 'u8[65536]{0}', space=vmem, size = 0x10000, scoped, tag = 'output window, operand 1, single buffered']
    #allocation12 [shape = 's32[1]{0}', space=sflag, size = 0x4, scoped, tag = 'scoped memory for tpu_custom_call.1']
    %11 = vsyncpa [#allocation3], 0
    %12 = vsyncpa [#allocation6], 0
    %13 = vsyncpa [#allocation9], 0
    %14 = vsyncpa [#allocation4], 0
    %15 = vsyncpa [#allocation12], 0
    // Predicated region
    $region2: #{tpu_custom_call.1} parent=1 // pred_check
      _
    $region3: #{tpu_custom_call.1} parent=1 // pred_check_branch
      %17 = sbr.rel (0) target = $region5
    $region4: #{tpu_custom_call.1} parent=1 // pred_region
      %s19 = ssub.s32 2048, 2048
      %20 = vsyncadd [#allocation3], %s19
      %s21 = sshll.u32 [#allocation2], 4
      %s22 = int_to_ptr.vmem [resolvable:$true] %s21
      %27 = dma.hbm_to_vmem [thread:$0]  %s0, 2048, %s22, [#allocation3], 128, 128, 8
    $region5: #{tpu_custom_call.1} parent=1 // pred_fallthru
      _
    // Predicated region
    $region6: #{tpu_custom_call.1} parent=1 // pred_check
      _
    $region7: #{tpu_custom_call.1} parent=1 // pred_check_branch
      %29 = sbr.rel (0) target = $region9
    $region8: #{tpu_custom_call.1} parent=1 // pred_region
      %s31 = ssub.s32 2048, 2048
      %32 = vsyncadd [#allocation6], %s31
      %s33 = sshll.u32 [#allocation5], 4
      %s34 = int_to_ptr.vmem [resolvable:$true] %s33
      %39 = dma.hbm_to_vmem [thread:$0]  %s1, 2048, %s34, [#allocation6], 128, 128, 8
    $region9: #{tpu_custom_call.1} parent=1 // pred_fallthru
      _
    // Predicated region
    $region10: #{tpu_custom_call.1} parent=1 // pred_check
      _
    $region11: #{tpu_custom_call.1} parent=1 // pred_check_branch
      %41 = sbr.rel (0) target = $region13
    $region12: #{tpu_custom_call.1} parent=1 // pred_region
      %s43 = ssub.s32 256, 256
      %44 = vsyncadd [#allocation6], %s43
      %s45 = sshll.u32 [#allocation7], 4
      %s46 = int_to_ptr.vmem [resolvable:$true] %s45
      %51 = dma.hbm_to_vmem [thread:$0]  %s2, 256, %s46, [#allocation6], 128, 128, 8
    $region13: #{tpu_custom_call.1} parent=1 // pred_fallthru
      _
    // Predicated region
    $region14: #{tpu_custom_call.1} parent=1 // pred_check
      _
    $region15: #{tpu_custom_call.1} parent=1 // pred_check_branch
      %53 = sbr.rel (0) target = $region17
    $region16: #{tpu_custom_call.1} parent=1 // pred_region
      %s55 = ssub.s32 256, 256
      %56 = vsyncadd [#allocation9], %s55
      %s57 = sshll.u32 [#allocation8], 4
      %s58 = int_to_ptr.vmem [resolvable:$true] %s57
      %63 = dma.hbm_to_vmem [thread:$0]  %s3, 256, %s58, [#allocation9], 128, 128, 8
    $region17: #{tpu_custom_call.1} parent=1 // pred_fallthru
      _
    // Predicated region
    $region18: #{tpu_custom_call.1} parent=1 // pred_check
      _
    $region19: #{tpu_custom_call.1} parent=1 // pred_check_branch
      %65 = sbr.rel (0) target = $region21
    $region20: #{tpu_custom_call.1} parent=1 // pred_region
      %66 = dma.done [#allocation3], 2048
    $region21: #{tpu_custom_call.1} parent=1 // pred_fallthru
      _
    // Predicated region
    $region22: #{tpu_custom_call.1} parent=1 // pred_check
      _
    $region23: #{tpu_custom_call.1} parent=1 // pred_check_branch
      %68 = sbr.rel (0) target = $region25
    $region24: #{tpu_custom_call.1} parent=1 // pred_region
      %69 = dma.done [#allocation6], 2048
    $region25: #{tpu_custom_call.1} parent=1 // pred_fallthru
      _
    // Predicated region
    $region26: #{tpu_custom_call.1} parent=1 // pred_check
      _
    $region27: #{tpu_custom_call.1} parent=1 // pred_check_branch
      %71 = sbr.rel (0) target = $region29
    $region28: #{tpu_custom_call.1} parent=1 // pred_region
      %72 = dma.done [#allocation6], 256
    $region29: #{tpu_custom_call.1} parent=1 // pred_fallthru
      _
    // Predicated region
    $region30: #{tpu_custom_call.1} parent=1 // pred_check
      _
    $region31: #{tpu_custom_call.1} parent=1 // pred_check_branch
      %74 = sbr.rel (0) target = $region33
    $region32: #{tpu_custom_call.1} parent=1 // pred_region
      %75 = dma.done [#allocation9], 256
    $region33: #{tpu_custom_call.1} parent=1 // pred_fallthru
      _
    %v76 = vld [vmem:[#allocation7] sm:$0xff]
    %v77 = vld [vmem:[#allocation7 + $0x8] sm:$0xff]
    %v78 = vld [vmem:[#allocation8] sm:$0xff]
    %v79 = vld [vmem:[#allocation8 + $0x8] sm:$0xff]
    %v80 = vld [vmem:[#allocation2] sm:$0xff]
    %v81 = vld [vmem:[#allocation2 + $0x8] sm:$0xff]
    %v82 = vld [vmem:[#allocation2 + $0x10] sm:$0xff]
    %v83 = vld [vmem:[#allocation2 + $0x18] sm:$0xff]
    %v84 = vld [vmem:[#allocation2 + $0x20] sm:$0xff]
    %v85 = vld [vmem:[#allocation2 + $0x28] sm:$0xff]
    %v86 = vld [vmem:[#allocation2 + $0x30] sm:$0xff]
    %v87 = vld [vmem:[#allocation2 + $0x38] sm:$0xff]
    %v88 = vld [vmem:[#allocation2 + $0x40] sm:$0xff]
    %v89 = vld [vmem:[#allocation2 + $0x48] sm:$0xff]
    %v90 = vld [vmem:[#allocation2 + $0x50] sm:$0xff]
    %v91 = vld [vmem:[#allocation2 + $0x58] sm:$0xff]
    %v92 = vld [vmem:[#allocation2 + $0x60] sm:$0xff]
    %v93 = vld [vmem:[#allocation2 + $0x68] sm:$0xff]
    %v94 = vld [vmem:[#allocation2 + $0x70] sm:$0xff]
    %v95 = vld [vmem:[#allocation2 + $0x78] sm:$0xff]
    %v96 = vld [vmem:[#allocation5] sm:$0xff]
    %v97 = vld [vmem:[#allocation5 + $0x8] sm:$0xff]
    %v98 = vld [vmem:[#allocation5 + $0x10] sm:$0xff]
    %v99 = vld [vmem:[#allocation5 + $0x18] sm:$0xff]
    %v100 = vld [vmem:[#allocation5 + $0x20] sm:$0xff]
    %v101 = vld [vmem:[#allocation5 + $0x28] sm:$0xff]
    %v102 = vld [vmem:[#allocation5 + $0x30] sm:$0xff]
    %v103 = vld [vmem:[#allocation5 + $0x38] sm:$0xff]
    %v104 = vld [vmem:[#allocation5 + $0x40] sm:$0xff]
    %v105 = vld [vmem:[#allocation5 + $0x48] sm:$0xff]
    %v106 = vld [vmem:[#allocation5 + $0x50] sm:$0xff]
    %v107 = vld [vmem:[#allocation5 + $0x58] sm:$0xff]
    %v108 = vld [vmem:[#allocation5 + $0x60] sm:$0xff]
    %v109 = vld [vmem:[#allocation5 + $0x68] sm:$0xff]
    %v110 = vld [vmem:[#allocation5 + $0x70] sm:$0xff]
    %v111 = vld [vmem:[#allocation5 + $0x78] sm:$0xff]
    %112 = vrot.lane.b32.xlu0 %v80, 64
    %v113 = vpop.permute.xlu0 %112
    %114 = vrot.lane.b32.xlu0 %v81, 64
    %v115 = vpop.permute.xlu0 %114
    %116 = vrot.lane.b32.xlu0 %v82, 64
    %v117 = vpop.permute.xlu0 %116
    %118 = vrot.lane.b32.xlu0 %v83, 64
    %v119 = vpop.permute.xlu0 %118
    %120 = vrot.lane.b32.xlu0 %v84, 64
    %v121 = vpop.permute.xlu0 %120
    %122 = vrot.lane.b32.xlu0 %v85, 64
    %v123 = vpop.permute.xlu0 %122
    %124 = vrot.lane.b32.xlu0 %v86, 64
    %v125 = vpop.permute.xlu0 %124
    %126 = vrot.lane.b32.xlu0 %v87, 64
    %v127 = vpop.permute.xlu0 %126
    %128 = vrot.lane.b32.xlu0 %v88, 64
    %v129 = vpop.permute.xlu0 %128
    %130 = vrot.lane.b32.xlu0 %v89, 64
    %v131 = vpop.permute.xlu0 %130
    %132 = vrot.lane.b32.xlu0 %v90, 64
    %v133 = vpop.permute.xlu0 %132
    %134 = vrot.lane.b32.xlu0 %v91, 64
    %v135 = vpop.permute.xlu0 %134
    %136 = vrot.lane.b32.xlu0 %v92, 64
    %v137 = vpop.permute.xlu0 %136
    %138 = vrot.lane.b32.xlu0 %v93, 64
    %v139 = vpop.permute.xlu0 %138
    %140 = vrot.lane.b32.xlu0 %v94, 64
    %v141 = vpop.permute.xlu0 %140
    %142 = vrot.lane.b32.xlu0 %v95, 64
    %v143 = vpop.permute.xlu0 %142
    %144 = vrot.lane.b32.xlu0 %v96, 64
    %v145 = vpop.permute.xlu0 %144
    %146 = vrot.lane.b32.xlu0 %v97, 64
    %v147 = vpop.permute.xlu0 %146
    %148 = vrot.lane.b32.xlu0 %v98, 64
    %v149 = vpop.permute.xlu0 %148
    %150 = vrot.lane.b32.xlu0 %v99, 64
    %v151 = vpop.permute.xlu0 %150
    %152 = vrot.lane.b32.xlu0 %v100, 64
    %v153 = vpop.permute.xlu0 %152
    %154 = vrot.lane.b32.xlu0 %v101, 64
    %v155 = vpop.permute.xlu0 %154
    %156 = vrot.lane.b32.xlu0 %v102, 64
    %v157 = vpop.permute.xlu0 %156
    %158 = vrot.lane.b32.xlu0 %v103, 64
    %v159 = vpop.permute.xlu0 %158
    %160 = vrot.lane.b32.xlu0 %v104, 64
    %v161 = vpop.permute.xlu0 %160
    %162 = vrot.lane.b32.xlu0 %v105, 64
    %v163 = vpop.permute.xlu0 %162
    %164 = vrot.lane.b32.xlu0 %v106, 64
    %v165 = vpop.permute.xlu0 %164
    %166 = vrot.lane.b32.xlu0 %v107, 64
    %v167 = vpop.permute.xlu0 %166
    %168 = vrot.lane.b32.xlu0 %v108, 64
    %v169 = vpop.permute.xlu0 %168
    %170 = vrot.lane.b32.xlu0 %v109, 64
    %v171 = vpop.permute.xlu0 %170
    %172 = vrot.lane.b32.xlu0 %v110, 64
    %v173 = vpop.permute.xlu0 %172
    %174 = vrot.lane.b32.xlu0 %v111, 64
    %v175 = vpop.permute.xlu0 %174
    %v176 = vmul.f32 %v80, %v76
    %v177 = vmul.f32 %v81, %v77
    %v178 = vmul.f32 %v82, %v76
    %v179 = vmul.f32 %v83, %v77
    %v180 = vmul.f32 %v84, %v76
    %v181 = vmul.f32 %v85, %v77
    %v182 = vmul.f32 %v86, %v76
    %v183 = vmul.f32 %v87, %v77
    %v184 = vmul.f32 %v88, %v76
    %v185 = vmul.f32 %v89, %v77
    %v186 = vmul.f32 %v90, %v76
    %v187 = vmul.f32 %v91, %v77
    %v188 = vmul.f32 %v92, %v76
    %v189 = vmul.f32 %v93, %v77
    %v190 = vmul.f32 %v94, %v76
    %v191 = vmul.f32 %v95, %v77
    %v192 = vmul.f32 %v113, %v78
    %v193 = vmul.f32 %v115, %v79
    %v194 = vmul.f32 %v117, %v78
    %v195 = vmul.f32 %v119, %v79
    %v196 = vmul.f32 %v121, %v78
    %v197 = vmul.f32 %v123, %v79
    %v198 = vmul.f32 %v125, %v78
    %v199 = vmul.f32 %v127, %v79
    %v200 = vmul.f32 %v129, %v78
    %v201 = vmul.f32 %v131, %v79
    %v202 = vmul.f32 %v133, %v78
    %v203 = vmul.f32 %v135, %v79
    %v204 = vmul.f32 %v137, %v78
    %v205 = vmul.f32 %v139, %v79
    %v206 = vmul.f32 %v141, %v78
    %v207 = vmul.f32 %v143, %v79
    %v208 = vadd.f32 %v176, %v192
    %v209 = vadd.f32 %v177, %v193
    %v210 = vadd.f32 %v178, %v194
    %v211 = vadd.f32 %v179, %v195
    %v212 = vadd.f32 %v180, %v196
    %v213 = vadd.f32 %v181, %v197
    %v214 = vadd.f32 %v182, %v198
    %v215 = vadd.f32 %v183, %v199
    %v216 = vadd.f32 %v184, %v200
    %v217 = vadd.f32 %v185, %v201
    %v218 = vadd.f32 %v186, %v202
    %v219 = vadd.f32 %v187, %v203
    %v220 = vadd.f32 %v188, %v204
    %v221 = vadd.f32 %v189, %v205
    %v222 = vadd.f32 %v190, %v206
    %v223 = vadd.f32 %v191, %v207
    %224 = vst [vmem:[#allocation10] sm:$0xff] %v208
    %225 = vst [vmem:[#allocation10 + $0x8] sm:$0xff] %v209
    %226 = vst [vmem:[#allocation10 + $0x10] sm:$0xff] %v210
    %227 = vst [vmem:[#allocation10 + $0x18] sm:$0xff] %v211
    %228 = vst [vmem:[#allocation10 + $0x20] sm:$0xff] %v212
    %229 = vst [vmem:[#allocation10 + $0x28] sm:$0xff] %v213
    %230 = vst [vmem:[#allocation10 + $0x30] sm:$0xff] %v214
    %231 = vst [vmem:[#allocation10 + $0x38] sm:$0xff] %v215
    %232 = vst [vmem:[#allocation10 + $0x40] sm:$0xff] %v216
    %233 = vst [vmem:[#allocation10 + $0x48] sm:$0xff] %v217
    %234 = vst [vmem:[#allocation10 + $0x50] sm:$0xff] %v218
    %235 = vst [vmem:[#allocation10 + $0x58] sm:$0xff] %v219
    %236 = vst [vmem:[#allocation10 + $0x60] sm:$0xff] %v220
    %237 = vst [vmem:[#allocation10 + $0x68] sm:$0xff] %v221
    %238 = vst [vmem:[#allocation10 + $0x70] sm:$0xff] %v222
    %239 = vst [vmem:[#allocation10 + $0x78] sm:$0xff] %v223
    %v240 = vmul.f32 %v96, %v76
    %v241 = vmul.f32 %v97, %v77
    %v242 = vmul.f32 %v98, %v76
    %v243 = vmul.f32 %v99, %v77
    %v244 = vmul.f32 %v100, %v76
    %v245 = vmul.f32 %v101, %v77
    %v246 = vmul.f32 %v102, %v76
    %v247 = vmul.f32 %v103, %v77
    %v248 = vmul.f32 %v104, %v76
    %v249 = vmul.f32 %v105, %v77
    %v250 = vmul.f32 %v106, %v76
    %v251 = vmul.f32 %v107, %v77
    %v252 = vmul.f32 %v108, %v76
    %v253 = vmul.f32 %v109, %v77
    %v254 = vmul.f32 %v110, %v76
    %v255 = vmul.f32 %v111, %v77
    %v256 = vmul.f32 %v145, %v78
    %v257 = vmul.f32 %v147, %v79
    %v258 = vmul.f32 %v149, %v78
    %v259 = vmul.f32 %v151, %v79
    %v260 = vmul.f32 %v153, %v78
    %v261 = vmul.f32 %v155, %v79
    %v262 = vmul.f32 %v157, %v78
    %v263 = vmul.f32 %v159, %v79
    %v264 = vmul.f32 %v161, %v78
    %v265 = vmul.f32 %v163, %v79
    %v266 = vmul.f32 %v165, %v78
    %v267 = vmul.f32 %v167, %v79
    %v268 = vmul.f32 %v169, %v78
    %v269 = vmul.f32 %v171, %v79
    %v270 = vmul.f32 %v173, %v78
    %v271 = vmul.f32 %v175, %v79
    %v272 = vadd.f32 %v240, %v256
    %v273 = vadd.f32 %v241, %v257
    %v274 = vadd.f32 %v242, %v258
    %v275 = vadd.f32 %v243, %v259
    %v276 = vadd.f32 %v244, %v260
    %v277 = vadd.f32 %v245, %v261
    %v278 = vadd.f32 %v246, %v262
    %v279 = vadd.f32 %v247, %v263
    %v280 = vadd.f32 %v248, %v264
    %v281 = vadd.f32 %v249, %v265
    %v282 = vadd.f32 %v250, %v266
    %v283 = vadd.f32 %v251, %v267
    %v284 = vadd.f32 %v252, %v268
    %v285 = vadd.f32 %v253, %v269
    %v286 = vadd.f32 %v254, %v270
    %v287 = vadd.f32 %v255, %v271
    %288 = vst [vmem:[#allocation11] sm:$0xff] %v272
    %289 = vst [vmem:[#allocation11 + $0x8] sm:$0xff] %v273
    %290 = vst [vmem:[#allocation11 + $0x10] sm:$0xff] %v274
    %291 = vst [vmem:[#allocation11 + $0x18] sm:$0xff] %v275
    %292 = vst [vmem:[#allocation11 + $0x20] sm:$0xff] %v276
    %293 = vst [vmem:[#allocation11 + $0x28] sm:$0xff] %v277
    %294 = vst [vmem:[#allocation11 + $0x30] sm:$0xff] %v278
    %295 = vst [vmem:[#allocation11 + $0x38] sm:$0xff] %v279
    %296 = vst [vmem:[#allocation11 + $0x40] sm:$0xff] %v280
    %297 = vst [vmem:[#allocation11 + $0x48] sm:$0xff] %v281
    %298 = vst [vmem:[#allocation11 + $0x50] sm:$0xff] %v282
    %299 = vst [vmem:[#allocation11 + $0x58] sm:$0xff] %v283
    %300 = vst [vmem:[#allocation11 + $0x60] sm:$0xff] %v284
    %301 = vst [vmem:[#allocation11 + $0x68] sm:$0xff] %v285
    %302 = vst [vmem:[#allocation11 + $0x70] sm:$0xff] %v286
    %303 = vst [vmem:[#allocation11 + $0x78] sm:$0xff] %v287
    // Predicated region
    $region34: #{tpu_custom_call.1} parent=1 // pred_check
      _
    $region35: #{tpu_custom_call.1} parent=1 // pred_check_branch
      %305 = sbr.rel (0) target = $region37
    $region36: #{tpu_custom_call.1} parent=1 // pred_region
      %s307 = ssub.s32 2048, 2048
      %308 = vsyncadd [#allocation4], %s307
      %s309 = sshll.u32 [#allocation10], 4
      %s310 = int_to_ptr.vmem [resolvable:$true] %s309
      %315 = dma.vmem_to_hbm [thread:$0]  %s310, 2048, %s4, [#allocation4], 128, 128, 8
    $region37: #{tpu_custom_call.1} parent=1 // pred_fallthru
      _
    // Predicated region
    $region38: #{tpu_custom_call.1} parent=1 // pred_check
      _
    $region39: #{tpu_custom_call.1} parent=1 // pred_check_branch
      %317 = sbr.rel (0) target = $region41
    $region40: #{tpu_custom_call.1} parent=1 // pred_region
      %s319 = ssub.s32 2048, 2048
      %320 = vsyncadd [#allocation12], %s319
      %s321 = sshll.u32 [#allocation11], 4
      %s322 = int_to_ptr.vmem [resolvable:$true] %s321
      %327 = dma.vmem_to_hbm [thread:$0]  %s322, 2048, %s5, [#allocation12], 128, 128, 8
    $region41: #{tpu_custom_call.1} parent=1 // pred_fallthru
      _
    // Predicated region
    $region42: #{tpu_custom_call.1} parent=1 // pred_check
      _
    $region43: #{tpu_custom_call.1} parent=1 // pred_check_branch
      %329 = sbr.rel (0) target = $region45
    $region44: #{tpu_custom_call.1} parent=1 // pred_region
      %330 = dma.done [#allocation4], 2048
    $region45: #{tpu_custom_call.1} parent=1 // pred_fallthru
      _
    // Predicated region
    $region46: #{tpu_custom_call.1} parent=1 // pred_check
      _
    $region47: #{tpu_custom_call.1} parent=1 // pred_check_branch
      %332 = sbr.rel (0) target = $region49
    $region48: #{tpu_custom_call.1} parent=1 // pred_region
      %333 = dma.done [#allocation12], 2048
    $region49: #{tpu_custom_call.1} parent=1 // pred_fallthru
      _
    %334 = vsyncpa [#allocation3], 1
    %335 = vsyncpa [#allocation6], 1
    %336 = vsyncpa [#allocation9], 1
    %337 = vsyncpa [#allocation4], 1
    %338 = vsyncpa [#allocation12], 1

</llo_original>
